<compile_context>
chip_gen: v7x
topology: tpu7x:2x2x1
jax: 0.10.0
libtpu: 0.0.40
codegen_flags: <defaults>
</compile_context>

<pallas_src>
import jax
import jax.numpy as jnp
from jax.experimental import pallas as pl
from jax.experimental.pallas import tpu as pltpu

_LANES = 128
_DEFAULT_TILE_ROWS = 512  # 512 x 128 x 4B = 256 KiB per f32 buffer


def _neg_kernel(x_ref, o_ref):
    # Pure lane-dense negation; keep the body minimal (store/HBM bound on v5e).
    o_ref[...] = -x_ref[...]


def _negate_lane_dense(x_pad, tile_rows):
    """x_pad: [M, 128] with M % tile_rows == 0. Returns -x_pad via Pallas."""
    m = x_pad.shape[0]
    grid = (m // tile_rows,)
    return pl.pallas_call(
        _neg_kernel,
        grid=grid,
        in_specs=[pl.BlockSpec((tile_rows, _LANES), lambda i: (i, 0))],
        out_specs=pl.BlockSpec((tile_rows, _LANES), lambda i: (i, 0)),
        out_shape=jax.ShapeDtypeStruct((m, _LANES), x_pad.dtype),
        input_output_aliases={0: 0},  # padded input is a dead temporary
        compiler_params=pltpu.CompilerParams(
            dimension_semantics=("parallel",),
        ),
    )(x_pad)


def force_stress_output(fgrad, sgrad, volume, tile_rows=_DEFAULT_TILE_ROWS):
    """fgrad: [N,3] dE/dpos; sgrad: [B,3,3] dE/dstrain; volume: [B].

    Returns (force [N,3], voigt_stress [B,6]).
    """
    n_atoms = fgrad.shape[0]
    b = sgrad.shape[0]
    total = n_atoms * 3

    # ---- force path: lane-dense tiled negation in Pallas ----
    rows_needed = pl.cdiv(total, _LANES)
    # tile rows: multiple of 8 (sublane), no bigger than needed
    tile = min(tile_rows, ((rows_needed + 7) // 8) * 8)
    tile = max(8, ((tile + 7) // 8) * 8)
    padded_rows = ((rows_needed + tile - 1) // tile) * tile
    pad = padded_rows * _LANES - total

    x_pad = jnp.pad(fgrad.reshape(-1), (0, pad)).reshape(padded_rows, _LANES)
    neg_pad = _negate_lane_dense(x_pad, tile)
    force = neg_pad.reshape(-1)[:total].reshape(n_atoms, 3)

    # ---- stress path: tiny (B x 9) math stays in plain JAX (XLA fuses it) ----
    stress = -(sgrad.astype(jnp.float32)
               / volume.astype(jnp.float32).reshape(b, 1, 1))
    voigt = jnp.stack(
        [stress[:, 0, 0], stress[:, 1, 1], stress[:, 2, 2],
         stress[:, 0, 1], stress[:, 1, 2], stress[:, 0, 2]],
        axis=-1,
    ).astype(sgrad.dtype)

    return force, voigt


# ---------------------------------------------------------------------------
# Synthetic differentiable energy (stands in for the upstream GNN energy head).
# pos is strained exactly like sevenn does before the force/stress module:
#   pos' = pos + pos @ strain[batch]
# ---------------------------------------------------------------------------
def total_energy(pos, strain, batch):
    pos_strained = pos + jnp.einsum("nj,njk->nk", pos, strain[batch])
    e_atom = 0.5 * jnp.sum(pos_strained**2, axis=-1)
    return jnp.sum(e_atom)  # == data[KEY_ENERGY].sum()


if __name__ == "__main__":
    key = jax.random.PRNGKey(0)
    k_pos, k_cell, k_big = jax.random.split(key, 3)

    # --- small end-to-end test mirroring the module ---
    N_ATOMS, N_GRAPHS = 16, 2
    pos = jax.random.normal(k_pos, (N_ATOMS, 3), dtype=jnp.float32) * 2.0
    batch = jnp.repeat(jnp.arange(N_GRAPHS), N_ATOMS // N_GRAPHS)
    strain = jnp.zeros((N_GRAPHS, 3, 3), dtype=jnp.float32)  # grads taken at 0

    cell = (jnp.eye(3, dtype=jnp.float32)[None] * 5.0
            + 0.1 * jax.random.normal(k_cell, (N_GRAPHS, 3, 3), dtype=jnp.float32))
    volume = jnp.abs(jnp.linalg.det(cell))  # [B]

    # TODO(synk): torch.autograd.grad has no Pallas equivalent; gradients are
    # computed with jax.grad in plain JAX and fed to the Pallas kernel.
    fgrad, sgrad = jax.grad(total_energy, argnums=(0, 1))(pos, strain, batch)

    force, stress_voigt = force_stress_output(fgrad, sgrad, volume)
    jax.block_until_ready((force, stress_voigt))

    # Pure-JAX reference (mirrors the PyTorch forward, batch mode)
    force_ref = -fgrad
    stress_ref = -(sgrad / volume[:, None, None])
    voigt_ref = jnp.stack(
        [stress_ref[:, 0, 0], stress_ref[:, 1, 1], stress_ref[:, 2, 2],
         stress_ref[:, 0, 1], stress_ref[:, 1, 2], stress_ref[:, 0, 2]],
        axis=0,
    ).T

    assert force.shape == (N_ATOMS, 3) and stress_voigt.shape == (N_GRAPHS, 6)
    assert jnp.allclose(force, force_ref, atol=1e-6)
    assert jnp.allclose(stress_voigt, voigt_ref, atol=1e-6)

    # --- second check: multi-tile grid / padding path on a modest atom count ---
    N_BIG = 2048  # 3*N = 6144 elems -> 48 rows of 128 (still tiny in memory)
    fgrad_big = jax.random.normal(k_big, (N_BIG, 3), dtype=jnp.float32)
    sgrad_big = jnp.zeros((1, 3, 3), dtype=jnp.float32)
    vol_big = jnp.ones((1,), dtype=jnp.float32)
    force_big, _ = force_stress_output(fgrad_big, sgrad_big, vol_big, tile_rows=16)
    jax.block_until_ready(force_big)
    assert jnp.allclose(force_big, -fgrad_big, atol=1e-6)

    print("KERNEL_OK")
</pallas_src>

<mosaic_0001>
module attributes {stable_mosaic.version = 11 : i64} {
  func.func @_neg_kernel(%arg0: i32, %arg1: memref<8x128xf32, #tpu.memory_space<vmem>>, %arg2: memref<8x128xf32, #tpu.memory_space<vmem>>) attributes {dimension_semantics = [#tpu.dimension_semantics<parallel>], iteration_bounds = array<i64: 1>, scalar_prefetch = 0 : i64, scratch_operands = 0 : i64, tpu.core_type = #tpu.core_type<tc>, window_params = [{transform_indices = @transform_0, window_bounds = array<i64: 8, 128>}, {transform_indices = @transform_1, window_bounds = array<i64: 8, 128>}]} {
    %c0 = arith.constant 0 : index
    %c0_0 = arith.constant 0 : index
    %0 = vector.load %arg1[%c0, %c0_0] : memref<8x128xf32, #tpu.memory_space<vmem>>, vector<8x128xf32>
    %cst = arith.constant 0.000000e+00 : f32
    %1 = vector.broadcast %cst : f32 to vector<8x128xf32>
    %2 = arith.subf %1, %0 : vector<8x128xf32>
    %c0_1 = arith.constant 0 : index
    %c0_2 = arith.constant 0 : index
    %3 = vector.load %arg2[%c0_1, %c0_2] : memref<8x128xf32, #tpu.memory_space<vmem>>, vector<8x128xf32>
    tpu.vector_store %arg2[%c0_1, %c0_2], %2 {strides = array<i32>} : memref<8x128xf32, #tpu.memory_space<vmem>>, vector<8x128xf32>,
    return
  }
  func.func @transform_0(%arg0: i32) -> (i32, i32) {
    %c0_i32 = arith.constant 0 : i32
    %c0_i32_0 = arith.constant 0 : i32
    return %arg0, %c0_i32 : i32, i32
  }
  func.func @transform_1(%arg0: i32) -> (i32, i32) {
    %c0_i32 = arith.constant 0 : i32
    %c0_i32_0 = arith.constant 0 : i32
    return %arg0, %c0_i32 : i32, i32
  }
}

</mosaic_0001>

<llo_original>
// kernel: tpu_custom_call.1
$region0: #{tpu_custom_call.1}
  #allocation0 [shape = 'u32[]', space=smem, size = 0x4, offset = 0x4, fixed_abs, tag = 'smem constant byte address 0x4 - core index']
  #allocation1 [shape = 'u32[144,128]{1,0:T(1,128)}', space=vmem, size = 0x12000, scoped, tag = 'internal scratch']
  %s0 = inlined_call_operand.hbm [shape: f32[8,128], index: 0, kind: input, shape index: {}, may-alias: {0,1}]
  %s1 = inlined_call_operand.hbm [shape: f32[8,128], index: 1, kind: output, shape index: {}, may-alias: {0,1}]
  %s2 = sld [smem:[#allocation0]]
  $region18: #{tpu_custom_call.1} parent=0
    _
  %s4 = ssub.s32 1, %s2
  %s5 = scalar_select 0, %s4, %s2
  $region1: #{tpu_custom_call.1} parent=0
    #allocation2 [shape = 'u8[4096]{0}', space=vmem, size = 0x1000, scoped, tag = 'input window, operand 0, single buffered']
    #allocation3 [shape = 's32[1]{0}', space=sflag, size = 0x4, scoped, tag = 'scoped memory for tpu_custom_call.1']
    #allocation4 [shape = 's32[1]{0}', space=sflag, size = 0x4, scoped, tag = 'scoped memory for tpu_custom_call.1']
    #allocation5 [shape = 'u8[4096]{0}', space=vmem, size = 0x1000, scoped, tag = 'output window, operand 0, single buffered']
    %6 = vsyncpa [#allocation3], 0
    %7 = vsyncpa [#allocation4], 0
    // Predicated region
    $region2: #{tpu_custom_call.1} parent=1 // pred_check
      _
    $region3: #{tpu_custom_call.1} parent=1 // pred_check_branch
      %9 = sbr.rel (0) target = $region5
    $region4: #{tpu_custom_call.1} parent=1 // pred_region
      %s11 = ssub.s32 128, 128
      %12 = vsyncadd [#allocation3], %s11
      %s14 = sshll.u32 [#allocation2], 4
      %s15 = int_to_ptr.vmem [resolvable:$true] %s14
      %17 = dma.hbm_to_vmem [thread:$0]  %s0, 128, %s15, [#allocation3]
    $region5: #{tpu_custom_call.1} parent=1 // pred_fallthru
      _
    // Predicated region
    $region6: #{tpu_custom_call.1} parent=1 // pred_check
      _
    $region7: #{tpu_custom_call.1} parent=1 // pred_check_branch
      %19 = sbr.rel (0) target = $region9
    $region8: #{tpu_custom_call.1} parent=1 // pred_region
      %20 = dma.done [#allocation3], 128
    $region9: #{tpu_custom_call.1} parent=1 // pred_fallthru
      _
    %v21 = vld [vmem:[#allocation2] sm:$0xff]
    %v22 = vsub.f32 0.0, %v21
    %23 = vst [vmem:[#allocation5] sm:$0xff] %v22
    // Predicated region
    $region10: #{tpu_custom_call.1} parent=1 // pred_check
      _
    $region11: #{tpu_custom_call.1} parent=1 // pred_check_branch
      %25 = sbr.rel (0) target = $region13
    $region12: #{tpu_custom_call.1} parent=1 // pred_region
      %s27 = ssub.s32 128, 128
      %28 = vsyncadd [#allocation4], %s27
      %s30 = sshll.u32 [#allocation5], 4
      %s31 = int_to_ptr.vmem [resolvable:$true] %s30
      %33 = dma.vmem_to_hbm [thread:$0]  %s31, 128, %s1, [#allocation4]
    $region13: #{tpu_custom_call.1} parent=1 // pred_fallthru
      _
    // Predicated region
    $region14: #{tpu_custom_call.1} parent=1 // pred_check
      _
    $region15: #{tpu_custom_call.1} parent=1 // pred_check_branch
      %35 = sbr.rel (0) target = $region17
    $region16: #{tpu_custom_call.1} parent=1 // pred_region
      %36 = dma.done [#allocation4], 128
    $region17: #{tpu_custom_call.1} parent=1 // pred_fallthru
      _
    %37 = vsyncpa [#allocation3], 1
    %38 = vsyncpa [#allocation4], 1

</llo_original>
